<compile_context>
chip_gen: v7x
topology: tpu7x:2x2x1
jax: 0.10.0
libtpu: 0.0.40
codegen_flags: <defaults>
</compile_context>

<pallas_src>
import jax
import jax.numpy as jnp
from jax.experimental import pallas as pl
from jax.experimental.pallas import tpu as pltpu


def _round_up(x, m):
    return ((x + m - 1) // m) * m


def _vmem_budget_bytes():
    """Chip-aware VMEM budget: ~75% of physical, capped at 100 MiB.
    v7x (64 MiB/TC) -> 48 MiB; v5e/v6e (128 MiB) -> 96 MiB."""
    try:
        cap = int(pltpu.get_tpu_info().vmem_capacity_bytes)
    except Exception:  # interpret mode / unknown chip
        cap = 64 * 1024 * 1024
    return min(cap * 3 // 4, 100 * 1024 * 1024)


def _patch_embed_kernel(x_ref, w_ref, b_ref, o_ref):
    # x_ref: (TM, Kp) patch vectors; w_ref: (Kp, Np); b_ref: (1, Np) f32.
    acc = jnp.dot(x_ref[...], w_ref[...], preferred_element_type=jnp.float32)
    acc = acc + b_ref[...]
    o_ref[...] = acc.astype(o_ref.dtype)


def patch_embed(x, weight, bias, patch_size, *, compute_dtype=None,
                out_dtype=None, tm=None):
    """x: (B, C, H, W) NCHW.  weight: (E, C, ph, pw).  bias: (E,).
    Returns (B, num_patches, E) == proj(x).flatten(2).transpose(1, 2).

    compute_dtype: MXU feed dtype (e.g. jnp.bfloat16); accumulation stays f32.
    out_dtype: dtype of the stored output (default: x.dtype).
    tm: row-tile override; auto-picked (2048 f32 / 4096 bf16, VMEM-capped) if None.
    """
    B, C, H, W = x.shape
    E = weight.shape[0]
    ph, pw = patch_size
    Hp, Wp = H // ph, W // pw
    P = Hp * Wp
    out_dtype = x.dtype if out_dtype is None else jnp.dtype(out_dtype)

    # --- glue: extract non-overlapping patches, flattened in (C, kh, kw) order
    # (matches PyTorch OIHW conv weight layout).  Producer is marked fusible
    # into the kernel input (allow_input_fusion) to avoid an extra HBM pass.
    xp = x.reshape(B, C, Hp, ph, Wp, pw)
    xp = jnp.transpose(xp, (0, 2, 4, 1, 3, 5))
    xp = xp.reshape(B * P, C * ph * pw)

    wm = weight.reshape(E, C * ph * pw).T          # (K, E)
    bm = bias.reshape(1, E).astype(jnp.float32)    # bias added in f32

    if compute_dtype is not None:                  # e.g. bf16 feed to the MXU
        xp = xp.astype(compute_dtype)
        wm = wm.astype(compute_dtype)

    M, K = xp.shape
    N = E
    in_itemsize = jnp.dtype(xp.dtype).itemsize
    out_itemsize = jnp.dtype(out_dtype).itemsize

    # --- lane padding.  K zero-pad is REQUIRED for correctness (garbage lanes
    # would be accumulated by the matmul).  N is padded to a lane multiple and
    # at least 256 so narrow embeddings still fill the 256-wide MXU columns.
    # M is NOT padded: the grid uses cdiv and Pallas masks the ragged last tile.
    Kp = _round_up(K, 128)
    Np = max(_round_up(N, 128), 256)

    if Kp != K:
        xp = jnp.pad(xp, ((0, 0), (0, Kp - K)))
    if (Kp, Np) != (K, N):
        wm = jnp.pad(wm, ((0, Kp - K), (0, Np - N)))
    if Np != N:
        bm = jnp.pad(bm, ((0, 0), (0, Np - N)))

    # --- row-tile selection: big tiles amortize the ~0.35us per-grid-step
    # overhead; shrink to fit the chip's VMEM budget; always a sublane multiple.
    sub = 8 if in_itemsize >= 4 else (16 if in_itemsize == 2 else 32)
    if tm is None:
        tm = 2048 if in_itemsize >= 4 else 4096    # bf16 tiles can be 2x taller
    TM = _round_up(max(min(tm, M), 1), sub)

    budget = _vmem_budget_bytes()

    def _vmem_estimate(t):
        # double-buffered x tile + out tile, single-buffered weight + bias
        return (2 * t * Kp * in_itemsize + 2 * t * Np * out_itemsize
                + Kp * Np * in_itemsize + Np * 4)

    while TM > sub and _vmem_estimate(TM) > budget:
        TM = _round_up(TM // 2, sub)

    # Nudge to an even number of grid steps so the "parallel" M axis splits
    # evenly across v7x's two TensorCores (harmless on 1-TC chips).
    steps = pl.cdiv(M, TM)
    if steps > 1 and steps % 2 == 1:
        TM = _round_up(pl.cdiv(M, steps + 1), sub)
        steps = pl.cdiv(M, TM)

    cost = pl.CostEstimate(
        flops=2 * M * Kp * Np,
        transcendentals=0,
        bytes_accessed=(M * Kp + Kp * Np) * in_itemsize + Np * 4
        + M * Np * out_itemsize,
    )

    out = pl.pallas_call(
        _patch_embed_kernel,
        out_shape=jax.ShapeDtypeStruct((M, Np), out_dtype),
        grid_spec=pltpu.PrefetchScalarGridSpec(
            num_scalar_prefetch=0,
            grid=(steps,),
            in_specs=[
                # row tile of patch vectors (double-buffered by default)
                pl.BlockSpec((TM, Kp), lambda i: (i, 0)),
                # weight / bias: constant index_map -> fetched once, single buffer
                pl.BlockSpec((Kp, Np), lambda i: (0, 0),
                             pipeline_mode=pl.Buffered(1)),
                pl.BlockSpec((1, Np), lambda i: (0, 0),
                             pipeline_mode=pl.Buffered(1)),
            ],
            out_specs=pl.BlockSpec((TM, Np), lambda i: (i, 0)),
        ),
        compiler_params=pltpu.CompilerParams(
            dimension_semantics=("parallel",),           # M tiles are independent
            allow_input_fusion=[True, False, False],     # fuse patchify producer
            vmem_limit_bytes=budget,                     # chip-aware VMEM ceiling
        ),
        cost_estimate=cost,
    )(xp, wm, bm)

    return out[:, :N].reshape(B, P, E)


if __name__ == "__main__":
    # Small shapes consistent with the module: img=16, patch=4, C=4, E=32, B=2.
    B, C, H, W = 2, 4, 16, 16
    ph, pw = 4, 4
    E = 32

    key = jax.random.PRNGKey(0)
    kx, kw, kb = jax.random.split(key, 3)
    x = jax.random.normal(kx, (B, C, H, W), dtype=jnp.float32)
    weight = jax.random.normal(kw, (E, C, ph, pw), dtype=jnp.float32) * 0.02
    bias = jax.random.normal(kb, (E,), dtype=jnp.float32) * 0.02

    # Reference: lax conv == nn.Conv2d(stride=kernel), then flatten(2).transpose(1,2).
    ref = jax.lax.conv_general_dilated(
        x, weight, window_strides=(ph, pw), padding="VALID",
        dimension_numbers=("NCHW", "OIHW", "NCHW"))
    ref = ref + bias.reshape(1, E, 1, 1)
    ref = ref.reshape(B, E, -1).transpose(0, 2, 1)

    # f32 path, auto tiling (single tile at this toy size).
    y = patch_embed(x, weight, bias, (ph, pw))
    jax.block_until_ready(y)
    assert y.shape == (B, (H // ph) * (W // pw), E)
    assert jnp.allclose(y, ref, atol=1e-4, rtol=1e-4)

    # Force a multi-tile grid (even number of steps) to exercise pipelining.
    y_tiled = patch_embed(x, weight, bias, (ph, pw), tm=16)
    jax.block_until_ready(y_tiled)
    assert jnp.allclose(y_tiled, ref, atol=1e-4, rtol=1e-4)

    # Force a ragged last row-tile (M=32 with TM=24) to exercise masked writes.
    y_ragged = patch_embed(x, weight, bias, (ph, pw), tm=24)
    jax.block_until_ready(y_ragged)
    assert jnp.allclose(y_ragged, ref, atol=1e-4, rtol=1e-4)

    # bf16 feed to the MXU (f32 accumulation); looser tolerance for bf16 inputs.
    y_bf16 = patch_embed(x, weight, bias, (ph, pw), compute_dtype=jnp.bfloat16)
    jax.block_until_ready(y_bf16)
    assert jnp.allclose(y_bf16, ref, atol=2e-2, rtol=2e-2)

    # bf16 in + bf16 out (production configuration: halves HBM writeback too).
    y_bf16o = patch_embed(x, weight, bias, (ph, pw),
                          compute_dtype=jnp.bfloat16, out_dtype=jnp.bfloat16)
    jax.block_until_ready(y_bf16o)
    assert y_bf16o.dtype == jnp.bfloat16
    assert jnp.allclose(y_bf16o.astype(jnp.float32), ref, atol=3e-2, rtol=3e-2)

    print("KERNEL_OK")
</pallas_src>

<mosaic_0001>
module attributes {stable_mosaic.version = 11 : i64} {
  func.func @_patch_embed_kernel(%arg0: i32, %arg1: memref<32x128xf32, #tpu.memory_space<vmem>>, %arg2: memref<128x256xf32, #tpu.memory_space<vmem>>, %arg3: memref<1x256xf32, #tpu.memory_space<vmem>>, %arg4: memref<32x256xf32, #tpu.memory_space<vmem>>) attributes {dimension_semantics = [#tpu.dimension_semantics<parallel>], iteration_bounds = array<i64: 1>, scalar_prefetch = 0 : i64, scratch_operands = 0 : i64, tpu.core_type = #tpu.core_type<tc>, window_params = [{transform_indices = @transform_0, window_bounds = array<i64: 32, 128>}, {pipeline_mode = #tpu.pipeline_mode<synchronous>, transform_indices = @transform_1, window_bounds = array<i64: 128, 256>}, {pipeline_mode = #tpu.pipeline_mode<synchronous>, transform_indices = @transform_2, window_bounds = array<i64: 1, 256>}, {transform_indices = @transform_3, window_bounds = array<i64: 32, 256>}]} {
    %c0 = arith.constant 0 : index
    %c0_0 = arith.constant 0 : index
    %0 = vector.load %arg1[%c0, %c0_0] : memref<32x128xf32, #tpu.memory_space<vmem>>, vector<32x128xf32>
    %c0_1 = arith.constant 0 : index
    %c0_2 = arith.constant 0 : index
    %1 = vector.load %arg2[%c0_1, %c0_2] : memref<128x256xf32, #tpu.memory_space<vmem>>, vector<128x256xf32>
    %cst = arith.constant dense<0.000000e+00> : vector<32x256xf32>
    %2 = tpu.matmul %0, %1, %cst {dimension_numbers = #tpu.dot_dimension_numbers<[1], [0], [0], [1], [0, 0, 1, 1], [], []>} : vector<32x128xf32>, vector<128x256xf32>, vector<32x256xf32> -> vector<32x256xf32>
    %c0_3 = arith.constant 0 : index
    %c0_4 = arith.constant 0 : index
    %3 = vector.load %arg3[%c0_3, %c0_4] : memref<1x256xf32, #tpu.memory_space<vmem>>, vector<1x256xf32>
    %4 = vector.broadcast %3 : vector<1x256xf32> to vector<32x256xf32>
    %5 = arith.addf %2, %4 : vector<32x256xf32>
    %c0_5 = arith.constant 0 : index
    %c0_6 = arith.constant 0 : index
    %6 = vector.load %arg4[%c0_5, %c0_6] : memref<32x256xf32, #tpu.memory_space<vmem>>, vector<32x256xf32>
    tpu.vector_store %arg4[%c0_5, %c0_6], %5 {strides = array<i32>} : memref<32x256xf32, #tpu.memory_space<vmem>>, vector<32x256xf32>,
    return
  }
  func.func @transform_0(%arg0: i32) -> (i32, i32) {
    %c0_i32 = arith.constant 0 : i32
    %c0_i32_0 = arith.constant 0 : i32
    return %arg0, %c0_i32 : i32, i32
  }
  func.func @transform_1(%arg0: i32) -> (i32, i32) {
    %c0_i32 = arith.constant 0 : i32
    %c0_i32_0 = arith.constant 0 : i32
    %c0_i32_1 = arith.constant 0 : i32
    return %c0_i32, %c0_i32_0 : i32, i32
  }
  func.func @transform_2(%arg0: i32) -> (i32, i32) {
    %c0_i32 = arith.constant 0 : i32
    %c0_i32_0 = arith.constant 0 : i32
    %c0_i32_1 = arith.constant 0 : i32
    return %c0_i32, %c0_i32_0 : i32, i32
  }
  func.func @transform_3(%arg0: i32) -> (i32, i32) {
    %c0_i32 = arith.constant 0 : i32
    %c0_i32_0 = arith.constant 0 : i32
    return %arg0, %c0_i32 : i32, i32
  }
}

</mosaic_0001>

<llo_original>
// kernel: tpu_custom_call.1
$region0: #{tpu_custom_call.1}
  #allocation0 [shape = 'u32[]', space=smem, size = 0x4, offset = 0x4, fixed_abs, tag = 'smem constant byte address 0x4 - core index']
  #allocation1 [shape = 'u32[144,128]{1,0:T(1,128)}', space=vmem, size = 0x12000, scoped, tag = 'internal scratch']
  %s0 = inlined_call_operand.hbm [shape: f32[32,128], index: 0, kind: input, shape index: {}]
  %s1 = inlined_call_operand.hbm [shape: f32[128,256], index: 1, kind: input, shape index: {}]
  %s2 = inlined_call_operand.vmem [shape: f32[1,256], index: 2, kind: input, shape index: {}]
  %s3 = inlined_call_operand.hbm [shape: f32[32,256], index: 3, kind: output, shape index: {}]
  %s4 = sld [smem:[#allocation0]]
  $region30: #{tpu_custom_call.1} parent=0
    _
  %s6 = ssub.s32 1, %s4
  %s7 = scalar_select 0, %s6, %s4
  $region1: #{tpu_custom_call.1} parent=0
    #allocation2 [shape = 'u8[16384]{0}', space=vmem, size = 0x4000, scoped, tag = 'input window, operand 0, single buffered']
    #allocation3 [shape = 's32[1]{0}', space=sflag, size = 0x4, scoped, tag = 'scoped memory for tpu_custom_call.1']
    #allocation4 [shape = 's32[1]{0}', space=sflag, size = 0x4, scoped, tag = 'scoped memory for tpu_custom_call.1']
    #allocation5 [shape = 'u8[131072]{0}', space=vmem, size = 0x20000, scoped, tag = 'input window, operand 1, single buffered']
    #allocation6 [shape = 's32[1]{0}', space=sflag, size = 0x4, scoped, tag = 'scoped memory for tpu_custom_call.1']
    #allocation7 [shape = 'u8[32768]{0}', space=vmem, size = 0x8000, scoped, tag = 'output window, operand 0, single buffered']
    %8 = vsyncpa [#allocation3], 0
    %9 = vsyncpa [#allocation6], 0
    %10 = vsyncpa [#allocation4], 0
    // Predicated region
    $region2: #{tpu_custom_call.1} parent=1 // pred_check
      _
    $region3: #{tpu_custom_call.1} parent=1 // pred_check_branch
      %12 = sbr.rel (0) target = $region5
    $region4: #{tpu_custom_call.1} parent=1 // pred_region
      %s14 = ssub.s32 512, 512
      %15 = vsyncadd [#allocation3], %s14
      %s16 = sshll.u32 [#allocation2], 4
      %s17 = int_to_ptr.vmem [resolvable:$true] %s16
      %22 = dma.hbm_to_vmem [thread:$0]  %s0, 512, %s17, [#allocation3], 128, 128, 8
    $region5: #{tpu_custom_call.1} parent=1 // pred_fallthru
      _
    // Predicated region
    $region6: #{tpu_custom_call.1} parent=1 // pred_check
      _
    $region7: #{tpu_custom_call.1} parent=1 // pred_check_branch
      %24 = sbr.rel (0) target = $region9
    $region8: #{tpu_custom_call.1} parent=1 // pred_region
      %s26 = ssub.s32 4096, 4096
      %27 = vsyncadd [#allocation6], %s26
      %s28 = sshll.u32 [#allocation5], 4
      %s29 = int_to_ptr.vmem [resolvable:$true] %s28
      %34 = dma.hbm_to_vmem [thread:$0]  %s1, 4096, %s29, [#allocation6], 256, 256, 16
    $region9: #{tpu_custom_call.1} parent=1 // pred_fallthru
      _
    // Predicated region
    $region10: #{tpu_custom_call.1} parent=1 // pred_check
      _
    $region11: #{tpu_custom_call.1} parent=1 // pred_check_branch
      %36 = sbr.rel (0) target = $region13
    $region12: #{tpu_custom_call.1} parent=1 // pred_region
      _
    $region13: #{tpu_custom_call.1} parent=1 // pred_fallthru
      _
    // Predicated region
    $region14: #{tpu_custom_call.1} parent=1 // pred_check
      _
    $region15: #{tpu_custom_call.1} parent=1 // pred_check_branch
      %38 = sbr.rel (0) target = $region17
    $region16: #{tpu_custom_call.1} parent=1 // pred_region
      %39 = dma.done [#allocation3], 512
    $region17: #{tpu_custom_call.1} parent=1 // pred_fallthru
      _
    // Predicated region
    $region18: #{tpu_custom_call.1} parent=1 // pred_check
      _
    $region19: #{tpu_custom_call.1} parent=1 // pred_check_branch
      %41 = sbr.rel (0) target = $region21
    $region20: #{tpu_custom_call.1} parent=1 // pred_region
      %42 = dma.done [#allocation6], 4096
    $region21: #{tpu_custom_call.1} parent=1 // pred_fallthru
      _
    %v43 = vld [vmem:[#allocation2] sm:$0xff]
    %v44 = vld [vmem:[#allocation2 + $0x8] sm:$0xff]
    %v45 = vld [vmem:[#allocation2 + $0x10] sm:$0xff]
    %v46 = vld [vmem:[#allocation2 + $0x18] sm:$0xff]
    %v47 = vld [vmem:[#allocation5] sm:$0xff]
    %v48 = vld [vmem:[#allocation5 + $0x8] sm:$0xff]
    %v49 = vld [vmem:[#allocation5 + $0x10] sm:$0xff]
    %v50 = vld [vmem:[#allocation5 + $0x18] sm:$0xff]
    %v51 = vld [vmem:[#allocation5 + $0x20] sm:$0xff]
    %v52 = vld [vmem:[#allocation5 + $0x28] sm:$0xff]
    %v53 = vld [vmem:[#allocation5 + $0x30] sm:$0xff]
    %v54 = vld [vmem:[#allocation5 + $0x38] sm:$0xff]
    %v55 = vld [vmem:[#allocation5 + $0x40] sm:$0xff]
    %v56 = vld [vmem:[#allocation5 + $0x48] sm:$0xff]
    %v57 = vld [vmem:[#allocation5 + $0x50] sm:$0xff]
    %v58 = vld [vmem:[#allocation5 + $0x58] sm:$0xff]
    %v59 = vld [vmem:[#allocation5 + $0x60] sm:$0xff]
    %v60 = vld [vmem:[#allocation5 + $0x68] sm:$0xff]
    %v61 = vld [vmem:[#allocation5 + $0x70] sm:$0xff]
    %v62 = vld [vmem:[#allocation5 + $0x78] sm:$0xff]
    %v63 = vld [vmem:[#allocation5 + $0x80] sm:$0xff]
    %v64 = vld [vmem:[#allocation5 + $0x88] sm:$0xff]
    %v65 = vld [vmem:[#allocation5 + $0x90] sm:$0xff]
    %v66 = vld [vmem:[#allocation5 + $0x98] sm:$0xff]
    %v67 = vld [vmem:[#allocation5 + $0xa0] sm:$0xff]
    %v68 = vld [vmem:[#allocation5 + $0xa8] sm:$0xff]
    %v69 = vld [vmem:[#allocation5 + $0xb0] sm:$0xff]
    %v70 = vld [vmem:[#allocation5 + $0xb8] sm:$0xff]
    %v71 = vld [vmem:[#allocation5 + $0xc0] sm:$0xff]
    %v72 = vld [vmem:[#allocation5 + $0xc8] sm:$0xff]
    %v73 = vld [vmem:[#allocation5 + $0xd0] sm:$0xff]
    %v74 = vld [vmem:[#allocation5 + $0xd8] sm:$0xff]
    %v75 = vld [vmem:[#allocation5 + $0xe0] sm:$0xff]
    %v76 = vld [vmem:[#allocation5 + $0xe8] sm:$0xff]
    %v77 = vld [vmem:[#allocation5 + $0xf0] sm:$0xff]
    %v78 = vld [vmem:[#allocation5 + $0xf8] sm:$0xff]
    %v79 = vld [vmem:[%s2] sm:$0x3]
    %v81 = vlaneseq
    %v82 = vshrl.u32 %v81, 7
    %v83 = vsub.s32 0, %v82
    %v84 = vrot.slane %v79, %v83
    %v85 = vlaneseq
    %v86 = vshrl.u32 %v85, 7
    %v87 = vsub.s32 1, %v86
    %v88 = vrot.slane %v79, %v87
    %91 = vmatprep.subr.mxu0 %v48
    %92 = vmatpush1.msra.mxu0 %v47
    %93 = vmatprep.subr.mxu0 %v50
    %94 = vmatpush1.msra.mxu0 %v49
    %95 = vmatprep.subr.mxu0 %v52
    %96 = vmatpush1.msra.mxu0 %v51
    %97 = vmatprep.subr.mxu0 %v54
    %98 = vmatpush1.msra.mxu0 %v53
    %99 = vmatprep.subr.mxu0 %v56
    %100 = vmatpush1.msra.mxu0 %v55
    %101 = vmatprep.subr.mxu0 %v58
    %102 = vmatpush1.msra.mxu0 %v57
    %103 = vmatprep.subr.mxu0 %v60
    %104 = vmatpush1.msra.mxu0 %v59
    %105 = vmatprep.subr.mxu0 %v62
    %106 = vmatpush1.msra.mxu0 %v61
    %107 = vmatprep.subr.mxu0 %v64
    %108 = vmatpush1.msra.mxu0 %v63
    %109 = vmatprep.subr.mxu0 %v66
    %110 = vmatpush1.msra.mxu0 %v65
    %111 = vmatprep.subr.mxu0 %v68
    %112 = vmatpush1.msra.mxu0 %v67
    %113 = vmatprep.subr.mxu0 %v70
    %114 = vmatpush1.msra.mxu0 %v69
    %115 = vmatprep.subr.mxu0 %v72
    %116 = vmatpush1.msra.mxu0 %v71
    %117 = vmatprep.subr.mxu0 %v74
    %118 = vmatpush1.msra.mxu0 %v73
    %119 = vmatprep.subr.mxu0 %v76
    %120 = vmatpush1.msra.mxu0 %v75
    %121 = vmatprep.subr.mxu0 %v78
    %122 = vmatpush1.msra.mxu0 %v77
    %123 = vmatprep.subr.mxu0 0.0
    %124 = vmatpush1.msra.mxu0 0.0
    %125 = vmatprep.subr.mxu0 0.0
    %126 = vmatpush1.msra.mxu0 0.0
    %127 = vmatprep.subr.mxu0 0.0
    %128 = vmatpush1.msra.mxu0 0.0
    %129 = vmatprep.subr.mxu0 0.0
    %130 = vmatpush1.msra.mxu0 0.0
    %131 = vmatprep.subr.mxu0 0.0
    %132 = vmatpush1.msra.mxu0 0.0
    %133 = vmatprep.subr.mxu0 0.0
    %134 = vmatpush1.msra.mxu0 0.0
    %135 = vmatprep.subr.mxu0 0.0
    %136 = vmatpush1.msra.mxu0 0.0
    %137 = vmatprep.subr.mxu0 0.0
    %138 = vmatpush1.msra.mxu0 0.0
    %139 = vmatprep.subr.mxu0 0.0
    %140 = vmatpush1.msra.mxu0 0.0
    %141 = vmatprep.subr.mxu0 0.0
    %142 = vmatpush1.msra.mxu0 0.0
    %143 = vmatprep.subr.mxu0 0.0
    %144 = vmatpush1.msra.mxu0 0.0
    %145 = vmatprep.subr.mxu0 0.0
    %146 = vmatpush1.msra.mxu0 0.0
    %147 = vmatprep.subr.mxu0 0.0
    %148 = vmatpush1.msra.mxu0 0.0
    %149 = vmatprep.subr.mxu0 0.0
    %150 = vmatpush1.msra.mxu0 0.0
    %151 = vmatprep.subr.mxu0 0.0
    %152 = vmatpush1.msra.mxu0 0.0
    %153 = vmatprep.subr.mxu0 0.0
    %154 = vmatpush1.msra.mxu0 0.0
    %155 = vmatprep.mubr.f32.mxu0 0.0
    %156 = vmatmul.mubr.f32.gmra.mrb[0].mxu0 %v43
    %v157 = vpop.f32.mrb[0].mxu0
    %v158 = vadd.f32 %v84, %v157
    %v159 = vpop.f32.mrb[0].mxu0
    %v160 = vadd.f32 %v88, %v159
    %161 = vmatprep.mubr.f32.mxu0 0.0
    %162 = vmatmul.mubr.f32.gmra.mrb[0].mxu0 %v44
    %v163 = vpop.f32.mrb[0].mxu0
    %v164 = vadd.f32 %v84, %v163
    %v165 = vpop.f32.mrb[0].mxu0
    %v166 = vadd.f32 %v88, %v165
    %167 = vmatprep.mubr.f32.mxu0 0.0
    %168 = vmatmul.mubr.f32.gmra.mrb[0].mxu0 %v45
    %v169 = vpop.f32.mrb[0].mxu0
    %v170 = vadd.f32 %v84, %v169
    %v171 = vpop.f32.mrb[0].mxu0
    %v172 = vadd.f32 %v88, %v171
    %173 = vmatprep.mubr.f32.mxu0 0.0
    %174 = vmatmul.mubr.f32.gmra.mrb[0].mxu0 %v46
    %v175 = vpop.f32.mrb[0].mxu0
    %v176 = vadd.f32 %v84, %v175
    %v177 = vpop.f32.mrb[0].mxu0
    %v178 = vadd.f32 %v88, %v177
    %179 = vdwg.mxu0
    %180 = vst [vmem:[#allocation7] sm:$0xff] %v158
    %181 = vst [vmem:[#allocation7 + $0x8] sm:$0xff] %v160
    %182 = vst [vmem:[#allocation7 + $0x10] sm:$0xff] %v164
    %183 = vst [vmem:[#allocation7 + $0x18] sm:$0xff] %v166
    %184 = vst [vmem:[#allocation7 + $0x20] sm:$0xff] %v170
    %185 = vst [vmem:[#allocation7 + $0x28] sm:$0xff] %v172
    %186 = vst [vmem:[#allocation7 + $0x30] sm:$0xff] %v176
    %187 = vst [vmem:[#allocation7 + $0x38] sm:$0xff] %v178
    // Predicated region
    $region22: #{tpu_custom_call.1} parent=1 // pred_check
      _
    $region23: #{tpu_custom_call.1} parent=1 // pred_check_branch
      %189 = sbr.rel (0) target = $region25
    $region24: #{tpu_custom_call.1} parent=1 // pred_region
      %s191 = ssub.s32 1024, 1024
      %192 = vsyncadd [#allocation4], %s191
      %s193 = sshll.u32 [#allocation7], 4
      %s194 = int_to_ptr.vmem [resolvable:$true] %s193
      %199 = dma.vmem_to_hbm [thread:$0]  %s194, 1024, %s3, [#allocation4], 256, 256, 16
    $region25: #{tpu_custom_call.1} parent=1 // pred_fallthru
      _
    // Predicated region
    $region26: #{tpu_custom_call.1} parent=1 // pred_check
      _
    $region27: #{tpu_custom_call.1} parent=1 // pred_check_branch
      %201 = sbr.rel (0) target = $region29
    $region28: #{tpu_custom_call.1} parent=1 // pred_region
      %202 = dma.done [#allocation4], 1024
    $region29: #{tpu_custom_call.1} parent=1 // pred_fallthru
      _
    %203 = vsyncpa [#allocation3], 1
    %204 = vsyncpa [#allocation6], 1
    %205 = vsyncpa [#allocation4], 1

</llo_original>
